<compile_context>
chip_gen: v6e
topology: v6e:2x2x1
jax: 0.10.0
libtpu: 0.0.40
codegen_flags: <defaults>
</compile_context>

<pallas_src>
import jax
import jax.numpy as jnp
from jax import lax
from jax.experimental import pallas as pl
from jax.experimental.pallas import tpu as pltpu

_LANE = 128
_VMEM_BUDGET_BYTES = 24 * 1024 * 1024   # conservative: fits v5e/v6e/v7x with headroom


def mlp_kernel(x_ref, w1_ref, b1_ref, w2_ref, b2_ref, w3_ref, b3_ref,
               w4_ref, b4_ref, o_ref):
    """One batch tile. x_ref is [bt, in_dim] f32; activations run [features, bt]."""
    # fc1 + relu, fully in f32 (bn1 / dropout1 are Identity in the default config).
    # Contract dim 1 of both operands: (128, in) x (bt, in) -> (128, bt); the small
    # operand transpose goes through the XLU, which is otherwise idle here.
    h = lax.dot_general(w1_ref[...], x_ref[...],
                        dimension_numbers=(((1,), (1,)), ((), ())),
                        preferred_element_type=jnp.float32)
    h = jnp.maximum(h + b1_ref[...], 0.0)                     # (128, bt) f32
    # fc2 + relu: bf16 operands on the MXU, f32 accumulation + f32 epilogue.
    h = jnp.dot(w2_ref[...], h.astype(jnp.bfloat16), preferred_element_type=jnp.float32)
    h = jnp.maximum(h + b2_ref[...], 0.0)                     # (64, bt) f32
    # fc3 + relu
    h = jnp.dot(w3_ref[...], h.astype(jnp.bfloat16), preferred_element_type=jnp.float32)
    h = jnp.maximum(h + b3_ref[...], 0.0)                     # (32, bt) f32
    # fc4 (N = 1): VPU multiply + sublane (XLU) reduce instead of an N=1 MXU matmul.
    logits = jnp.sum(h * w4_ref[...], axis=0, keepdims=True) + b4_ref[0]   # (1, bt)
    # sigmoid = 1 / (1 + exp(-z)): exp and the approximate reciprocal both ride the
    # EUP slot, keeping the VALU free for the epilogue above.
    o_ref[...] = pl.reciprocal(1.0 + jnp.exp(-logits), approx=True)        # lane-dense
    # TODO(synk): BatchNorm1d / Dropout branches (use_batch_norm/use_dropout=True) are
    # Identity in the default constructor; if enabled they would fuse here as a
    # per-feature scale/shift plus a pltpu.prng_random_bits mask.


def _vmem_capped_tile(in_dim):
    """Largest lane-tile (multiple of 128) whose working set fits the VMEM budget."""
    # Crude per-batch-column estimate (bytes): double-buffered f32 x tile plus the
    # f32/bf16 copies of the 128/64/32-wide activations and the (1, bt) output.
    per_lane = 2 * 4 * in_dim + (4 + 2) * 128 + (4 + 2) * 64 + (4 + 4) * 32 + 32
    per_lane = int(per_lane * 1.5)           # 50% slack for compiler temporaries
    cap = (_VMEM_BUDGET_BYTES // per_lane) // _LANE * _LANE
    return max(_LANE, cap)


def _pick_batch_tile(B, in_dim, max_tile):
    """Pick (tile, num_tiles): fat tiles, but keep >=2 tiles so both v7x TCs get work."""
    b128 = _LANE * pl.cdiv(B, _LANE)                       # batch rounded to lane multiple
    cap = min(max_tile, _vmem_capped_tile(in_dim))
    cap = max(_LANE, (cap // _LANE) * _LANE)
    if b128 <= cap:
        n_blocks = b128 // _LANE
        # Whole batch fits in one tile: split into two tiles when possible so the
        # "parallel" grid axis actually feeds both TensorCores on v7x.
        bt = _LANE * pl.cdiv(n_blocks, 2) if n_blocks >= 2 else b128
    else:
        bt = cap                                           # b128 > cap => >= 2 tiles
    num_tiles = pl.cdiv(b128, bt)
    return bt, num_tiles


def _xla_forward(x, params):
    """Fused pure-XLA forward (exact f32 math). Used for tiny batches and as reference."""
    h = x.astype(jnp.float32)
    for i, (w, b) in enumerate(params):
        h = h @ w.T + b
        if i < 3:
            h = jnp.maximum(h, 0.0)
    return jax.nn.sigmoid(h)


def neural_network_forward(x, params, *, max_tile=8192, min_pallas_batch=1024):
    """x: [B, input_size] float32 -> [B, 1] float32 (matches NeuralNetwork.forward)."""
    (w1, b1), (w2, b2), (w3, b3), (w4, b4) = params   # PyTorch layout: W [out, in], b [out]
    B, in_dim = x.shape

    if B < min_pallas_batch:
        # Tiny batches: the fixed pallas_call launch + single-step grid overhead
        # dominates; a fused XLA dot chain wins.
        return _xla_forward(x, params)

    bt, num_tiles = _pick_batch_tile(B, in_dim, max_tile)
    b_pad = num_tiles * bt

    x32 = x.astype(jnp.float32)                        # fed as-is; no transpose/pad copy
    w1c = w1.astype(jnp.float32)                       # (128, in)  f32 (fc1 stays f32)
    w2c = w2.astype(jnp.bfloat16)                      # (64, 128)
    w3c = w3.astype(jnp.bfloat16)                      # (32, 64)
    b1c = b1.astype(jnp.float32).reshape(-1, 1)        # (128, 1)
    b2c = b2.astype(jnp.float32).reshape(-1, 1)        # (64, 1)
    b3c = b3.astype(jnp.float32).reshape(-1, 1)        # (32, 1)
    w4c = w4.astype(jnp.float32).reshape(-1, 1)        # (32, 1): lane-broadcast column
    b4c = b4.astype(jnp.float32).reshape(1,)           # scalar -> SMEM

    # Constant weights/biases: same block every step, so they stay VMEM-resident.
    # They are double-buffered by the default pipeline; at <50 KiB total that waste
    # is a conscious, negligible cost (vs. risking non-default pipeline_mode support).
    const = lambda shape: pl.BlockSpec(shape, lambda i: (0, 0))

    out = pl.pallas_call(
        mlp_kernel,
        out_shape=jax.ShapeDtypeStruct((1, b_pad), jnp.float32),
        grid=(num_tiles,),
        in_specs=[
            # x tile in its natural [B, in_dim] layout; ragged last block is left to
            # Pallas (garbage rows feed only discarded output columns).
            pl.BlockSpec((bt, in_dim), lambda i: (i, 0)),
            const((128, in_dim)), const((128, 1)),                 # fc1
            const((64, 128)),     const((64, 1)),                  # fc2
            const((32, 64)),      const((32, 1)),                  # fc3
            const((32, 1)),                                        # fc4 weight
            pl.BlockSpec(memory_space=pltpu.MemorySpace.SMEM),     # fc4 bias scalar
        ],
        out_specs=pl.BlockSpec((1, bt), lambda i: (0, i)),         # lane-dense output
        compiler_params=pltpu.CompilerParams(
            dimension_semantics=("parallel",),                     # shard tiles across TCs
            vmem_limit_bytes=32 * 1024 * 1024),                    # cover the fat tiles
    )(x32, w1c, b1c, w2c, b2c, w3c, b3c, w4c, b4c)

    return out[0, :B].reshape(B, 1)


def init_params(key, input_size):
    """Deterministic init mimicking nn.Linear default (U[-1/sqrt(fan_in), 1/sqrt(fan_in)]).

    PyTorch layout: weight [out_features, in_features], bias [out_features].
    """
    dims = [input_size, 128, 64, 32, 1]
    params = []
    for i in range(4):
        fan_in, fan_out = dims[i], dims[i + 1]
        key, kw, kb = jax.random.split(key, 3)
        bound = 1.0 / jnp.sqrt(jnp.float32(fan_in))
        w = jax.random.uniform(kw, (fan_out, fan_in), jnp.float32, -bound, bound)
        b = jax.random.uniform(kb, (fan_out,), jnp.float32, -bound, bound)
        params.append((w, b))
    return params


def reference_forward(x, params):
    """Pure-JAX f32 reference of the PyTorch forward."""
    return _xla_forward(x, params)


if __name__ == "__main__":
    key = jax.random.PRNGKey(0)
    key, kx = jax.random.split(key)
    input_size = 32
    params = init_params(key, input_size)

    # 1) Tiny batch -> pure-XLA fallback path (Pallas overhead not worth it here).
    x_small = jax.random.normal(kx, (8, input_size), jnp.float32)
    out_small = jax.block_until_ready(neural_network_forward(x_small, params))
    ref_small = reference_forward(x_small, params)
    assert out_small.shape == (8, 1), out_small.shape
    assert jnp.allclose(out_small, ref_small, atol=1e-5)

    # 2) Force the Pallas kernel on a ragged batch: B=300 -> 2 tiles of 256 lanes,
    #    last block reads past the array end (handled by Pallas, outputs discarded).
    key, kx2 = jax.random.split(key)
    x_rag = jax.random.normal(kx2, (300, input_size), jnp.float32)
    out_rag = jax.block_until_ready(
        neural_network_forward(x_rag, params, min_pallas_batch=0))
    ref_rag = reference_forward(x_rag, params)
    assert out_rag.shape == (300, 1), out_rag.shape
    # fc2/fc3 run bf16 on the MXU (f32 accumulation) -> loosened tolerance vs f32 ref.
    assert jnp.allclose(out_rag, ref_rag, atol=1e-2), \
        float(jnp.max(jnp.abs(out_rag - ref_rag)))

    # 3) Batch above the fallback threshold -> natural Pallas path (2 tiles of 1024,
    #    one per TensorCore on v7x).
    key, kx3 = jax.random.split(key)
    x_big = jax.random.normal(kx3, (2048, input_size), jnp.float32)
    out_big = jax.block_until_ready(neural_network_forward(x_big, params))
    ref_big = reference_forward(x_big, params)
    assert out_big.shape == (2048, 1), out_big.shape
    assert jnp.allclose(out_big, ref_big, atol=1e-2), \
        float(jnp.max(jnp.abs(out_big - ref_big)))

    print("KERNEL_OK")
</pallas_src>

<mosaic_0001>
module attributes {stable_mosaic.version = 11 : i64} {
  func.func @mlp_kernel(%arg0: i32, %arg1: memref<256x32xf32, #tpu.memory_space<vmem>>, %arg2: memref<128x32xf32, #tpu.memory_space<vmem>>, %arg3: memref<128x1xf32, #tpu.memory_space<vmem>>, %arg4: memref<64x128xbf16, #tpu.memory_space<vmem>>, %arg5: memref<64x1xf32, #tpu.memory_space<vmem>>, %arg6: memref<32x64xbf16, #tpu.memory_space<vmem>>, %arg7: memref<32x1xf32, #tpu.memory_space<vmem>>, %arg8: memref<32x1xf32, #tpu.memory_space<vmem>>, %arg9: memref<1xf32, #tpu.memory_space<smem>>, %arg10: memref<1x256xf32, #tpu.memory_space<vmem>>) attributes {dimension_semantics = [#tpu.dimension_semantics<parallel>], iteration_bounds = array<i64: 2>, scalar_prefetch = 0 : i64, scratch_operands = 0 : i64, tpu.core_type = #tpu.core_type<tc>, window_params = [{transform_indices = @transform_0, window_bounds = array<i64: 256, 32>}, {pipeline_mode = #tpu.pipeline_mode<synchronous>, transform_indices = @transform_1, window_bounds = array<i64: 128, 32>}, {pipeline_mode = #tpu.pipeline_mode<synchronous>, transform_indices = @transform_2, window_bounds = array<i64: 128, 1>}, {pipeline_mode = #tpu.pipeline_mode<synchronous>, transform_indices = @transform_3, window_bounds = array<i64: 64, 128>}, {pipeline_mode = #tpu.pipeline_mode<synchronous>, transform_indices = @transform_4, window_bounds = array<i64: 64, 1>}, {pipeline_mode = #tpu.pipeline_mode<synchronous>, transform_indices = @transform_5, window_bounds = array<i64: 32, 64>}, {pipeline_mode = #tpu.pipeline_mode<synchronous>, transform_indices = @transform_6, window_bounds = array<i64: 32, 1>}, {pipeline_mode = #tpu.pipeline_mode<synchronous>, transform_indices = @transform_7, window_bounds = array<i64: 32, 1>}, {transform_indices = @transform_8, window_bounds = array<i64: 1>}, {transform_indices = @transform_9, window_bounds = array<i64: 1, 256>}]} {
    %c0 = arith.constant 0 : index
    %c0_0 = arith.constant 0 : index
    %0 = vector.load %arg2[%c0, %c0_0] : memref<128x32xf32, #tpu.memory_space<vmem>>, vector<128x32xf32>
    %c0_1 = arith.constant 0 : index
    %c0_2 = arith.constant 0 : index
    %1 = vector.load %arg1[%c0_1, %c0_2] : memref<256x32xf32, #tpu.memory_space<vmem>>, vector<256x32xf32>
    %cst = arith.constant dense<0.000000e+00> : vector<128x256xf32>
    %2 = tpu.matmul %0, %1, %cst {dimension_numbers = #tpu.dot_dimension_numbers<[1], [1], [0], [0], [0, 0, 1, 0], [], []>} : vector<128x32xf32>, vector<256x32xf32>, vector<128x256xf32> -> vector<128x256xf32>
    %c0_3 = arith.constant 0 : index
    %c0_4 = arith.constant 0 : index
    %3 = vector.load %arg3[%c0_3, %c0_4] : memref<128x1xf32, #tpu.memory_space<vmem>>, vector<128x1xf32>
    %4 = vector.broadcast %3 : vector<128x1xf32> to vector<128x256xf32>
    %5 = arith.addf %2, %4 : vector<128x256xf32>
    %cst_5 = arith.constant 0.000000e+00 : f32
    %6 = vector.broadcast %cst_5 : f32 to vector<128x256xf32>
    %7 = arith.maximumf %5, %6 : vector<128x256xf32>
    %c0_6 = arith.constant 0 : index
    %c0_7 = arith.constant 0 : index
    %8 = vector.load %arg4[%c0_6, %c0_7] : memref<64x128xbf16, #tpu.memory_space<vmem>>, vector<64x128xbf16>
    %9 = arith.truncf %7 : vector<128x256xf32> to vector<128x256xbf16>
    %cst_8 = arith.constant dense<0.000000e+00> : vector<64x256xf32>
    %10 = tpu.matmul %8, %9, %cst_8 {dimension_numbers = #tpu.dot_dimension_numbers<[1], [0], [0], [1], [0, 0, 1, 1], [], []>} : vector<64x128xbf16>, vector<128x256xbf16>, vector<64x256xf32> -> vector<64x256xf32>
    %c0_9 = arith.constant 0 : index
    %c0_10 = arith.constant 0 : index
    %11 = vector.load %arg5[%c0_9, %c0_10] : memref<64x1xf32, #tpu.memory_space<vmem>>, vector<64x1xf32>
    %12 = vector.broadcast %11 : vector<64x1xf32> to vector<64x256xf32>
    %13 = arith.addf %10, %12 : vector<64x256xf32>
    %cst_11 = arith.constant 0.000000e+00 : f32
    %14 = vector.broadcast %cst_11 : f32 to vector<64x256xf32>
    %15 = arith.maximumf %13, %14 : vector<64x256xf32>
    %c0_12 = arith.constant 0 : index
    %c0_13 = arith.constant 0 : index
    %16 = vector.load %arg6[%c0_12, %c0_13] : memref<32x64xbf16, #tpu.memory_space<vmem>>, vector<32x64xbf16>
    %17 = arith.truncf %15 : vector<64x256xf32> to vector<64x256xbf16>
    %cst_14 = arith.constant dense<0.000000e+00> : vector<32x256xf32>
    %18 = tpu.matmul %16, %17, %cst_14 {dimension_numbers = #tpu.dot_dimension_numbers<[1], [0], [0], [1], [0, 0, 1, 1], [], []>} : vector<32x64xbf16>, vector<64x256xbf16>, vector<32x256xf32> -> vector<32x256xf32>
    %c0_15 = arith.constant 0 : index
    %c0_16 = arith.constant 0 : index
    %19 = vector.load %arg7[%c0_15, %c0_16] : memref<32x1xf32, #tpu.memory_space<vmem>>, vector<32x1xf32>
    %20 = vector.broadcast %19 : vector<32x1xf32> to vector<32x256xf32>
    %21 = arith.addf %18, %20 : vector<32x256xf32>
    %cst_17 = arith.constant 0.000000e+00 : f32
    %22 = vector.broadcast %cst_17 : f32 to vector<32x256xf32>
    %23 = arith.maximumf %21, %22 : vector<32x256xf32>
    %c0_18 = arith.constant 0 : index
    %c0_19 = arith.constant 0 : index
    %24 = vector.load %arg8[%c0_18, %c0_19] : memref<32x1xf32, #tpu.memory_space<vmem>>, vector<32x1xf32>
    %25 = vector.broadcast %24 : vector<32x1xf32> to vector<32x256xf32>
    %26 = arith.mulf %23, %25 : vector<32x256xf32>
    %cst_20 = arith.constant dense<0.000000e+00> : vector<256xf32>
    %27 = vector.multi_reduction <add>, %26, %cst_20 [0] : vector<32x256xf32> to vector<256xf32>
    %28 = vector.shape_cast %27 : vector<256xf32> to vector<1x256xf32>
    %c0_21 = arith.constant 0 : index
    %29 = memref.load %arg9[%c0_21] : memref<1xf32, #tpu.memory_space<smem>>
    %30 = vector.broadcast %29 : f32 to vector<1x256xf32>
    %31 = arith.addf %28, %30 : vector<1x256xf32>
    %cst_22 = arith.constant 0.000000e+00 : f32
    %32 = vector.broadcast %cst_22 : f32 to vector<1x256xf32>
    %33 = arith.subf %32, %31 : vector<1x256xf32>
    %34 = math.exp %33 : vector<1x256xf32>
    %cst_23 = arith.constant 1.000000e+00 : f32
    %35 = vector.broadcast %cst_23 : f32 to vector<1x256xf32>
    %36 = arith.addf %35, %34 : vector<1x256xf32>
    %37 = tpu.reciprocal %36 {approx = true} : vector<1x256xf32> -> vector<1x256xf32>
    %c0_24 = arith.constant 0 : index
    %c0_25 = arith.constant 0 : index
    %38 = vector.load %arg10[%c0_24, %c0_25] : memref<1x256xf32, #tpu.memory_space<vmem>>, vector<1x256xf32>
    tpu.vector_store %arg10[%c0_24, %c0_25], %37 {strides = array<i32>} : memref<1x256xf32, #tpu.memory_space<vmem>>, vector<1x256xf32>,
    return
  }
  func.func @transform_0(%arg0: i32) -> (i32, i32) {
    %c0_i32 = arith.constant 0 : i32
    %c0_i32_0 = arith.constant 0 : i32
    return %arg0, %c0_i32 : i32, i32
  }
  func.func @transform_1(%arg0: i32) -> (i32, i32) {
    %c0_i32 = arith.constant 0 : i32
    %c0_i32_0 = arith.constant 0 : i32
    %c0_i32_1 = arith.constant 0 : i32
    return %c0_i32, %c0_i32_0 : i32, i32
  }
  func.func @transform_2(%arg0: i32) -> (i32, i32) {
    %c0_i32 = arith.constant 0 : i32
    %c0_i32_0 = arith.constant 0 : i32
    %c0_i32_1 = arith.constant 0 : i32
    return %c0_i32, %c0_i32_0 : i32, i32
  }
  func.func @transform_3(%arg0: i32) -> (i32, i32) {
    %c0_i32 = arith.constant 0 : i32
    %c0_i32_0 = arith.constant 0 : i32
    %c0_i32_1 = arith.constant 0 : i32
    return %c0_i32, %c0_i32_0 : i32, i32
  }
  func.func @transform_4(%arg0: i32) -> (i32, i32) {
    %c0_i32 = arith.constant 0 : i32
    %c0_i32_0 = arith.constant 0 : i32
    %c0_i32_1 = arith.constant 0 : i32
    return %c0_i32, %c0_i32_0 : i32, i32
  }
  func.func @transform_5(%arg0: i32) -> (i32, i32) {
    %c0_i32 = arith.constant 0 : i32
    %c0_i32_0 = arith.constant 0 : i32
    %c0_i32_1 = arith.constant 0 : i32
    return %c0_i32, %c0_i32_0 : i32, i32
  }
  func.func @transform_6(%arg0: i32) -> (i32, i32) {
    %c0_i32 = arith.constant 0 : i32
    %c0_i32_0 = arith.constant 0 : i32
    %c0_i32_1 = arith.constant 0 : i32
    return %c0_i32, %c0_i32_0 : i32, i32
  }
  func.func @transform_7(%arg0: i32) -> (i32, i32) {
    %c0_i32 = arith.constant 0 : i32
    %c0_i32_0 = arith.constant 0 : i32
    %c0_i32_1 = arith.constant 0 : i32
    return %c0_i32, %c0_i32_0 : i32, i32
  }
  func.func @transform_8(%arg0: i32) -> i32 {
    %c0_i32 = arith.constant 0 : i32
    %c0_i32_0 = arith.constant 0 : i32
    return %c0_i32 : i32
  }
  func.func @transform_9(%arg0: i32) -> (i32, i32) {
    %c0_i32 = arith.constant 0 : i32
    %c0_i32_0 = arith.constant 0 : i32
    return %c0_i32, %arg0 : i32, i32
  }
}

</mosaic_0001>

<llo_original>
// kernel: tpu_custom_call.1
$region0: #{tpu_custom_call.1}
  #allocation0 [shape = 'u32[]', space=smem, size = 0x4, offset = 0x4, fixed_abs, tag = 'smem constant byte address 0x4 - core index']
  #allocation1 [shape = 'u32[144,128]{1,0:T(1,128)}', space=vmem, size = 0x12000, scoped, tag = 'internal scratch']
  #allocation2 [shape = 'f32[1]{0:T(128)S(6)}', space=smem, size = 0x200, scoped, tag = 'scoped memory for tpu_custom_call.1']
  %s0 = inlined_call_operand.vmem [shape: f32[300,32], index: 0, kind: input, shape index: {}]
  %s1 = inlined_call_operand.vmem [shape: f32[128,32], index: 1, kind: input, shape index: {}]
  %s2 = inlined_call_operand.vmem [shape: f32[128,1], index: 2, kind: input, shape index: {}]
  %s3 = inlined_call_operand.vmem [shape: bf16[64,128], index: 3, kind: input, shape index: {}]
  %s4 = inlined_call_operand.vmem [shape: f32[64,1], index: 4, kind: input, shape index: {}]
  %s5 = inlined_call_operand.vmem [shape: bf16[32,64], index: 5, kind: input, shape index: {}]
  %s6 = inlined_call_operand.vmem [shape: f32[32,1], index: 6, kind: input, shape index: {}]
  %s7 = inlined_call_operand.vmem [shape: f32[32,1], index: 7, kind: input, shape index: {}]
  %s8 = inlined_call_operand.<no memory space> [shape: f32[1], index: 8, kind: input, shape index: {}]
  %s9 = inlined_call_operand.hbm [shape: f32[1,512], index: 9, kind: output, shape index: {}]
  %s10 = sld [smem:[#allocation0]]
  $region69: #{tpu_custom_call.1} parent=0
    _
  %s12 = ssub.s32 1, %s10
  %s13 = scalar_select 0, %s12, %s10
  %14 = sst [smem:[#allocation2]] %s8
  $region1: #{tpu_custom_call.1} parent=0
    #allocation3 [shape = 'u8[2048]{0}', space=vmem, size = 0x800, scoped, tag = 'output window, operand 0']
    #allocation4 [shape = 's32[2]{0}', space=sflag, size = 0x8, scoped, tag = 'scoped memory for tpu_custom_call.1']
    %15 = vsyncpa [#allocation4], 0
    %s16 = scalar_lea.sflag [#allocation4], 1
    %17 = vsyncpa %s16, 0
    loop: start=0, step=1, limit=4
    $region2: #{tpu_custom_call.1} parent=1 // loop_pre_header
      _
    $region3: #{tpu_custom_call.1} parent=1 // loop_header
      %s19 = sphi 0, %s23
      %p20 = scmp.ge.s32.totalorder %s19, 4
      %s29 = sphi 0, %s31
      %s32 = sphi 0, %s29
      %s33 = sphi 0, %s32
      %s49 = sphi 0, %s33
      %s53 = sphi 0, %s53
      %s55 = sphi 0, %s53
      %s56 = sphi 0, %s55
      %s70 = sphi 0, %s56
      %s74 = sphi 0, %s74
      %s76 = sphi 0, %s74
      %s77 = sphi 0, %s76
      %s91 = sphi 0, %s77
      %s95 = sphi 0, %s95
      %s97 = sphi 0, %s95
      %s98 = sphi 0, %s97
      %s112 = sphi 0, %s98
      %s116 = sphi 0, %s116
      %s118 = sphi 0, %s116
      %s119 = sphi 0, %s118
      %s133 = sphi 0, %s119
      %s137 = sphi 0, %s137
      %s139 = sphi 0, %s137
      %s140 = sphi 0, %s139
      %s154 = sphi 0, %s140
      %s158 = sphi 0, %s158
      %s160 = sphi 0, %s158
      %s161 = sphi 0, %s160
      %s175 = sphi 0, %s161
      %s179 = sphi 0, %s179
      %s181 = sphi 0, %s179
      %s182 = sphi 0, %s181
      %s196 = sphi 0, %s182
      %s200 = sphi 0, %s200
      %s202 = sphi 0, %s200
      %s203 = sphi 0, %s202
      %s217 = sphi 0, %s203
      %s223 = sphi 0, %s225
      %s226 = sphi 0, %s223
      %s227 = sphi 0, %s226
      %s243 = sphi 0, %s227
    $region4: #{tpu_custom_call.1} parent=1 // loop_header_branch
      %22 = sbr.rel (%p20) target = $region8
    $region5: #{tpu_custom_call.1} parent=1 // loop_body
      %s24 = ssub.s32 %s19, 1
      %s25 = ssub.s32 %s19, 2
      %s26 = sadd.s32 %s19, 1
      %s27 = ssub.s32 %s19, %s26
      %p28 = scmp.eq.s32.totalorder %s27, 0
      %s30 = sadd.s32 %s29, 1
      %s31 = scalar_select %p28, %s29, %s30
      %p34 = pneg %p28
      %p35 = scmp.eq.s32.totalorder %s19, 1
      %p36 = por %p34, %p35
      %p37 = scmp.ne.s32.totalorder %s29, %s32
      %p38 = scmp.eq.s32.totalorder %s19, 0
      %p39 = por %p37, %p38
      %p40 = scmp.ne.s32.totalorder %s29, %s32
      %p41 = scmp.eq.s32.totalorder %s24, 1
      %p42 = por %p40, %p41
      %p43 = scmp.ne.s32.totalorder %s32, %s33
      %p44 = scmp.eq.s32.totalorder %s24, 0
      %p45 = por %p43, %p44
      %p46 = scmp.ne.s32.totalorder %s32, %s33
      %p47 = scmp.eq.s32.totalorder %s25, 1
      %p48 = por %p46, %p47
      %p50 = scmp.ne.s32.totalorder %s33, %s49
      %p51 = scmp.eq.s32.totalorder %s25, 0
      %p52 = por %p50, %p51
      %s54 = sadd.s32 %s53, 1
      %p57 = scmp.eq.s32.totalorder %s19, 1
      %p58 = scmp.ne.s32.totalorder %s53, %s55
      %p59 = scmp.eq.s32.totalorder %s19, 0
      %p60 = por %p58, %p59
      %p61 = scmp.ne.s32.totalorder %s53, %s55
      %p62 = scmp.eq.s32.totalorder %s24, 1
      %p63 = por %p61, %p62
      %p64 = scmp.ne.s32.totalorder %s55, %s56
      %p65 = scmp.eq.s32.totalorder %s24, 0
      %p66 = por %p64, %p65
      %p67 = scmp.ne.s32.totalorder %s55, %s56
      %p68 = scmp.eq.s32.totalorder %s25, 1
      %p69 = por %p67, %p68
      %p71 = scmp.ne.s32.totalorder %s56, %s70
      %p72 = scmp.eq.s32.totalorder %s25, 0
      %p73 = por %p71, %p72
      %s75 = sadd.s32 %s74, 1
      %p78 = scmp.eq.s32.totalorder %s19, 1
      %p79 = scmp.ne.s32.totalorder %s74, %s76
      %p80 = scmp.eq.s32.totalorder %s19, 0
      %p81 = por %p79, %p80
      %p82 = scmp.ne.s32.totalorder %s74, %s76
      %p83 = scmp.eq.s32.totalorder %s24, 1
      %p84 = por %p82, %p83
      %p85 = scmp.ne.s32.totalorder %s76, %s77
      %p86 = scmp.eq.s32.totalorder %s24, 0
      %p87 = por %p85, %p86
      %p88 = scmp.ne.s32.totalorder %s76, %s77
      %p89 = scmp.eq.s32.totalorder %s25, 1
      %p90 = por %p88, %p89
      %p92 = scmp.ne.s32.totalorder %s77, %s91
      %p93 = scmp.eq.s32.totalorder %s25, 0
      %p94 = por %p92, %p93
      %s96 = sadd.s32 %s95, 1
      %p99 = scmp.eq.s32.totalorder %s19, 1
      %p100 = scmp.ne.s32.totalorder %s95, %s97
      %p101 = scmp.eq.s32.totalorder %s19, 0
      %p102 = por %p100, %p101
      %p103 = scmp.ne.s32.totalorder %s95, %s97
      %p104 = scmp.eq.s32.totalorder %s24, 1
      %p105 = por %p103, %p104
      %p106 = scmp.ne.s32.totalorder %s97, %s98
      %p107 = scmp.eq.s32.totalorder %s24, 0
      %p108 = por %p106, %p107
      %p109 = scmp.ne.s32.totalorder %s97, %s98
      %p110 = scmp.eq.s32.totalorder %s25, 1
      %p111 = por %p109, %p110
      %p113 = scmp.ne.s32.totalorder %s98, %s112
      %p114 = scmp.eq.s32.totalorder %s25, 0
      %p115 = por %p113, %p114
      %s117 = sadd.s32 %s116, 1
      %p120 = scmp.eq.s32.totalorder %s19, 1
      %p121 = scmp.ne.s32.totalorder %s116, %s118
      %p122 = scmp.eq.s32.totalorder %s19, 0
      %p123 = por %p121, %p122
      %p124 = scmp.ne.s32.totalorder %s116, %s118
      %p125 = scmp.eq.s32.totalorder %s24, 1
      %p126 = por %p124, %p125
      %p127 = scmp.ne.s32.totalorder %s118, %s119
      %p128 = scmp.eq.s32.totalorder %s24, 0
      %p129 = por %p127, %p128
      %p130 = scmp.ne.s32.totalorder %s118, %s119
      %p131 = scmp.eq.s32.totalorder %s25, 1
      %p132 = por %p130, %p131
      %p134 = scmp.ne.s32.totalorder %s119, %s133
      %p135 = scmp.eq.s32.totalorder %s25, 0
      %p136 = por %p134, %p135
      %s138 = sadd.s32 %s137, 1
      %p141 = scmp.eq.s32.totalorder %s19, 1
      %p142 = scmp.ne.s32.totalorder %s137, %s139
      %p143 = scmp.eq.s32.totalorder %s19, 0
      %p144 = por %p142, %p143
      %p145 = scmp.ne.s32.totalorder %s137, %s139
      %p146 = scmp.eq.s32.totalorder %s24, 1
      %p147 = por %p145, %p146
      %p148 = scmp.ne.s32.totalorder %s139, %s140
      %p149 = scmp.eq.s32.totalorder %s24, 0
      %p150 = por %p148, %p149
      %p151 = scmp.ne.s32.totalorder %s139, %s140
      %p152 = scmp.eq.s32.totalorder %s25, 1
      %p153 = por %p151, %p152
      %p155 = scmp.ne.s32.totalorder %s140, %s154
      %p156 = scmp.eq.s32.totalorder %s25, 0
      %p157 = por %p155, %p156
      %s159 = sadd.s32 %s158, 1
      %p162 = scmp.eq.s32.totalorder %s19, 1
      %p163 = scmp.ne.s32.totalorder %s158, %s160
      %p164 = scmp.eq.s32.totalorder %s19, 0
      %p165 = por %p163, %p164
      %p166 = scmp.ne.s32.totalorder %s158, %s160
      %p167 = scmp.eq.s32.totalorder %s24, 1
      %p168 = por %p166, %p167
      %p169 = scmp.ne.s32.totalorder %s160, %s161
      %p170 = scmp.eq.s32.totalorder %s24, 0
      %p171 = por %p169, %p170
      %p172 = scmp.ne.s32.totalorder %s160, %s161
      %p173 = scmp.eq.s32.totalorder %s25, 1
      %p174 = por %p172, %p173
      %p176 = scmp.ne.s32.totalorder %s161, %s175
      %p177 = scmp.eq.s32.totalorder %s25, 0
      %p178 = por %p176, %p177
      %s180 = sadd.s32 %s179, 1
      %p183 = scmp.eq.s32.totalorder %s19, 1
      %p184 = scmp.ne.s32.totalorder %s179, %s181
      %p185 = scmp.eq.s32.totalorder %s19, 0
      %p186 = por %p184, %p185
      %p187 = scmp.ne.s32.totalorder %s179, %s181
      %p188 = scmp.eq.s32.totalorder %s24, 1
      %p189 = por %p187, %p188
      %p190 = scmp.ne.s32.totalorder %s181, %s182
      %p191 = scmp.eq.s32.totalorder %s24, 0
      %p192 = por %p190, %p191
      %p193 = scmp.ne.s32.totalorder %s181, %s182
      %p194 = scmp.eq.s32.totalorder %s25, 1
      %p195 = por %p193, %p194
      %p197 = scmp.ne.s32.totalorder %s182, %s196
      %p198 = scmp.eq.s32.totalorder %s25, 0
      %p199 = por %p197, %p198
      %s201 = sadd.s32 %s200, 1
      %p204 = scmp.eq.s32.totalorder %s19, 1
      %p205 = scmp.ne.s32.totalorder %s200, %s202
      %p206 = scmp.eq.s32.totalorder %s19, 0
      %p207 = por %p205, %p206
      %p208 = scmp.ne.s32.totalorder %s200, %s202
      %p209 = scmp.eq.s32.totalorder %s24, 1
      %p210 = por %p208, %p209
      %p211 = scmp.ne.s32.totalorder %s202, %s203
      %p212 = scmp.eq.s32.totalorder %s24, 0
      %p213 = por %p211, %p212
      %p214 = scmp.ne.s32.totalorder %s202, %s203
      %p215 = scmp.eq.s32.totalorder %s25, 1
      %p216 = por %p214, %p215
      %p218 = scmp.ne.s32.totalorder %s203, %s217
      %p219 = scmp.eq.s32.totalorder %s25, 0
      %p220 = por %p218, %p219
      %s221 = ssub.s32 %s19, %s26
      %p222 = scmp.eq.s32.totalorder %s221, 0
      %s224 = sadd.s32 %s223, 1
      %s225 = scalar_select %p222, %s223, %s224
      %p228 = pneg %p222
      %p229 = scmp.eq.s32.totalorder %s19, 1
      %p230 = por %p228, %p229
      %p231 = scmp.ne.s32.totalorder %s223, %s226
      %p232 = scmp.eq.s32.totalorder %s19, 0
      %p233 = por %p231, %p232
      %p234 = scmp.ne.s32.totalorder %s223, %s226
      %p235 = scmp.eq.s32.totalorder %s24, 1
      %p236 = por %p234, %p235
      %p237 = scmp.ne.s32.totalorder %s226, %s227
      %p238 = scmp.eq.s32.totalorder %s24, 0
      %p239 = por %p237, %p238
      %p240 = scmp.ne.s32.totalorder %s226, %s227
      %p241 = scmp.eq.s32.totalorder %s25, 1
      %p242 = por %p240, %p241
      %p244 = scmp.ne.s32.totalorder %s227, %s243
      %p245 = scmp.eq.s32.totalorder %s25, 0
      %p246 = por %p244, %p245
      %p247 = scmp.le.s32.totalorder 1, %s19
      %p248 = scmp.lt.s32.totalorder %s19, 3
      %p249 = pnand %p247, %p248
      %p250 = pneg %p249
      // Predicated region
      $region9: #{tpu_custom_call.1} parent=5 // pred_check
        _
      $region10: #{tpu_custom_call.1} parent=5 // pred_check_branch
        %252 = sbr.rel (%p249) target = $region12
      $region11: #{tpu_custom_call.1} parent=5 // pred_region
        %s253 = ssub.s32 %s19, 1
        // Predicated region
        $region13: #{tpu_custom_call.1} parent=11 // pred_check
          %p254 = pneg %p66
        $region14: #{tpu_custom_call.1} parent=11 // pred_check_branch
          %256 = sbr.rel (%p254) target = $region16
        $region15: #{tpu_custom_call.1} parent=11 // pred_region
          _
        $region16: #{tpu_custom_call.1} parent=11 // pred_fallthru
          _
        // Predicated region
        $region17: #{tpu_custom_call.1} parent=11 // pred_check
          %p257 = pneg %p87
        $region18: #{tpu_custom_call.1} parent=11 // pred_check_branch
          %259 = sbr.rel (%p257) target = $region20
        $region19: #{tpu_custom_call.1} parent=11 // pred_region
          _
        $region20: #{tpu_custom_call.1} parent=11 // pred_fallthru
          _
        // Predicated region
        $region21: #{tpu_custom_call.1} parent=11 // pred_check
          %p260 = pneg %p108
        $region22: #{tpu_custom_call.1} parent=11 // pred_check_branch
          %262 = sbr.rel (%p260) target = $region24
        $region23: #{tpu_custom_call.1} parent=11 // pred_region
          _
        $region24: #{tpu_custom_call.1} parent=11 // pred_fallthru
          _
        // Predicated region
        $region25: #{tpu_custom_call.1} parent=11 // pred_check
          %p263 = pneg %p129
        $region26: #{tpu_custom_call.1} parent=11 // pred_check_branch
          %265 = sbr.rel (%p263) target = $region28
        $region27: #{tpu_custom_call.1} parent=11 // pred_region
          _
        $region28: #{tpu_custom_call.1} parent=11 // pred_fallthru
          _
        // Predicated region
        $region29: #{tpu_custom_call.1} parent=11 // pred_check
          %p266 = pneg %p150
        $region30: #{tpu_custom_call.1} parent=11 // pred_check_branch
          %268 = sbr.rel (%p266) target = $region32
        $region31: #{tpu_custom_call.1} parent=11 // pred_region
          _
        $region32: #{tpu_custom_call.1} parent=11 // pred_fallthru
          _
        // Predicated region
        $region33: #{tpu_custom_call.1} parent=11 // pred_check
          %p269 = pneg %p171
        $region34: #{tpu_custom_call.1} parent=11 // pred_check_branch
          %271 = sbr.rel (%p269) target = $region36
        $region35: #{tpu_custom_call.1} parent=11 // pred_region
          _
        $region36: #{tpu_custom_call.1} parent=11 // pred_fallthru
          _
        // Predicated region
        $region37: #{tpu_custom_call.1} parent=11 // pred_check
          %p272 = pneg %p192
        $region38: #{tpu_custom_call.1} parent=11 // pred_check_branch
          %274 = sbr.rel (%p272) target = $region40
        $region39: #{tpu_custom_call.1} parent=11 // pred_region
          _
        $region40: #{tpu_custom_call.1} parent=11 // pred_fallthru
          _
        // Predicated region
        $region41: #{tpu_custom_call.1} parent=11 // pred_check
          %p275 = pneg %p213
        $region42: #{tpu_custom_call.1} parent=11 // pred_check_branch
          %277 = sbr.rel (%p275) target = $region44
        $region43: #{tpu_custom_call.1} parent=11 // pred_region
          _
        $region44: #{tpu_custom_call.1} parent=11 // pred_fallthru
          _
      $region12: #{tpu_custom_call.1} parent=5 // pred_fallthru
        _
      %p278 = scmp.lt.s32.totalorder %s19, 2
      // Predicated region
      $region45: #{tpu_custom_call.1} parent=5 // pred_check
        %p279 = pneg %p278
      $region46: #{tpu_custom_call.1} parent=5 // pred_check_branch
        %281 = sbr.rel (%p279) target = $region48
      $region47: #{tpu_custom_call.1} parent=5 // pred_region
        // Predicated region
        $region49: #{tpu_custom_call.1} parent=47 // pred_check
          %p282 = pneg %p39
        $region50: #{tpu_custom_call.1} parent=47 // pred_check_branch
          %284 = sbr.rel (%p282) target = $region52
        $region51: #{tpu_custom_call.1} parent=47 // pred_region
          %s285 = smul.u32 32, %s19
          %s286 = ssub.s32 38, %s285
          %p287 = scmp.lt.s32.totalorder %s286, 32
          %s288 = scalar_select %p287, %s286, 32
          %s289 = smul.u32 128, %s288
          %p290 = scmp.lt.s32.totalorder %s285, 37
          %s291 = scalar_select %p290, %s285, 37
          %s292 = smul.addr %s291, 8
          %s293 = scalar_lea.vmem %s0, %s292
          %s294 = smul.u32 32, %s19
          %s295 = ssub.s32 38, %s294
          %p296 = scmp.lt.s32.totalorder %s295, 32
          %s297 = scalar_select %p296, %s295, 32
          %s298 = smul.u32 128, %s297
        $region52: #{tpu_custom_call.1} parent=47 // pred_fallthru
          _
      $region48: #{tpu_custom_call.1} parent=5 // pred_fallthru
        _
      %p299 = scmp.le.s32.totalorder 1, %s19
      %p300 = scmp.lt.s32.totalorder %s19, 3
      %p301 = pnand %p299, %p300
      %p302 = pneg %p301
      // Predicated region
      $region53: #{tpu_custom_call.1} parent=5 // pred_check
        _
      $region54: #{tpu_custom_call.1} parent=5 // pred_check_branch
        %304 = sbr.rel (%p301) target = $region56
      $region55: #{tpu_custom_call.1} parent=5 // pred_region
        %s305 = ssub.s32 %s19, 1
        %s306 = smul.u32 32, %s24
        %s307 = ssub.s32 38, %s306
        %p308 = scmp.lt.s32.totalorder %s307, 32
        %s309 = scalar_select %p308, %s307, 32
        %s310 = smul.u32 128, %s309
        %p311 = scmp.lt.s32.totalorder %s306, 37
        %s312 = scalar_select %p311, %s306, 37
        %s313 = smul.addr %s312, 8
        %s314 = scalar_lea.vmem %s0, %s313
        %p315 = pneg %p45
        %p316 = pneg %p42
        %p317 = pneg %p66
        %p318 = pneg %p63
        %p319 = pneg %p87
        %p320 = pneg %p84
        %p321 = pneg %p108
        %p322 = pneg %p105
        %p323 = pneg %p129
        %p324 = pneg %p126
        %p325 = pneg %p150
        %p326 = pneg %p147
        %p327 = pneg %p171
        %p328 = pneg %p168
        %p329 = pneg %p192
        %p330 = pneg %p189
        %p331 = pneg %p213
        %p332 = pneg %p210
        %p333 = pneg %p239
        %p334 = pneg %p236
        %s335 = sand.u32 %s226, 1
        %s336 = scalar_lea.sflag [#allocation4], %s335
        %s337 = sand.u32 %s226, 1
        %s338 = smul.addr %s337, 2
        %s339 = scalar_lea.vmem [#allocation3], %s338
        %s340 = smul.u32 32, %s24
        %s341 = ssub.s32 38, %s340
        %p342 = scmp.lt.s32.totalorder %s341, 32
        %s343 = scalar_select %p342, %s341, 32
        %s344 = smul.u32 128, %s343
        %p345 = scmp.lt.s32.totalorder %s340, 37
        %s346 = scalar_select %p345, %s340, 37
        %s347 = smul.addr %s346, 8
        %s348 = scalar_lea.vmem %s0, %s347
        %s349 = smul.u32 32, %s24
        %s350 = ssub.s32 38, %s349
        %p351 = scmp.lt.s32.totalorder %s350, 32
        %s352 = scalar_select %p351, %s350, 32
        %s353 = smul.u32 128, %s352
        %s354 = smul.u32 2, %s24
        %v356 = vld [vmem:[%s1] sm:$0xff]
        %v357 = vld [vmem:[%s1 + $0x8] sm:$0xff]
        %v358 = vld [vmem:[%s1 + $0x10] sm:$0xff]
        %v359 = vld [vmem:[%s1 + $0x18] sm:$0xff]
        %v360 = vld [vmem:[%s1 + $0x20] sm:$0xff]
        %v361 = vld [vmem:[%s1 + $0x28] sm:$0xff]
        %v362 = vld [vmem:[%s1 + $0x30] sm:$0xff]
        %v363 = vld [vmem:[%s1 + $0x38] sm:$0xff]
        %v364 = vld [vmem:[%s1 + $0x40] sm:$0xff]
        %v365 = vld [vmem:[%s1 + $0x48] sm:$0xff]
        %v366 = vld [vmem:[%s1 + $0x50] sm:$0xff]
        %v367 = vld [vmem:[%s1 + $0x58] sm:$0xff]
        %v368 = vld [vmem:[%s1 + $0x60] sm:$0xff]
        %v369 = vld [vmem:[%s1 + $0x68] sm:$0xff]
        %v370 = vld [vmem:[%s1 + $0x70] sm:$0xff]
        %v371 = vld [vmem:[%s1 + $0x78] sm:$0xff]
        %v372 = vld [vmem:[%s348] sm:$0xff]
        %v373 = vld [vmem:[%s348 + $0x8] sm:$0xff]
        %v374 = vld [vmem:[%s348 + $0x10] sm:$0xff]
        %v375 = vld [vmem:[%s348 + $0x18] sm:$0xff]
        %v376 = vld [vmem:[%s348 + $0x20] sm:$0xff]
        %v377 = vld [vmem:[%s348 + $0x28] sm:$0xff]
        %v378 = vld [vmem:[%s348 + $0x30] sm:$0xff]
        %v379 = vld [vmem:[%s348 + $0x38] sm:$0xff]
        %v380 = vld [vmem:[%s348 + $0x40] sm:$0xff]
        %v381 = vld [vmem:[%s348 + $0x48] sm:$0xff]
        %v382 = vld [vmem:[%s348 + $0x50] sm:$0xff]
        %v383 = vld [vmem:[%s348 + $0x58] sm:$0xff]
        %v384 = vld [vmem:[%s348 + $0x60] sm:$0xff]
        %v385 = vld [vmem:[%s348 + $0x68] sm:$0xff]
        %v386 = vld [vmem:[%s348 + $0x70] sm:$0xff]
        %v387 = vld [vmem:[%s348 + $0x78] sm:$0xff]
        %v388 = vld [vmem:[%s348 + $0x80] sm:$0xff]
        %v389 = vld [vmem:[%s348 + $0x88] sm:$0xff]
        %v390 = vld [vmem:[%s348 + $0x90] sm:$0xff]
        %v391 = vld [vmem:[%s348 + $0x98] sm:$0xff]
        %v392 = vld [vmem:[%s348 + $0xa0] sm:$0xff]
        %v393 = vld [vmem:[%s348 + $0xa8] sm:$0xff]
        %v394 = vld [vmem:[%s348 + $0xb0] sm:$0xff]
        %v395 = vld [vmem:[%s348 + $0xb8] sm:$0xff]
        %v396 = vld [vmem:[%s348 + $0xc0] sm:$0xff]
        %v397 = vld [vmem:[%s348 + $0xc8] sm:$0xff]
        %v398 = vld [vmem:[%s348 + $0xd0] sm:$0xff]
        %v399 = vld [vmem:[%s348 + $0xd8] sm:$0xff]
        %v400 = vld [vmem:[%s348 + $0xe0] sm:$0xff]
        %v401 = vld [vmem:[%s348 + $0xe8] sm:$0xff]
        %v402 = vld [vmem:[%s348 + $0xf0] sm:$0xff]
        %v403 = vld [vmem:[%s348 + $0xf8] sm:$0xff]
        %v404 = vld [vmem:[%s2] sm:$0xff]
        %v405 = vld [vmem:[%s2 + $0x8] sm:$0xff]
        %v406 = vld [vmem:[%s2 + $0x10] sm:$0xff]
        %v407 = vld [vmem:[%s2 + $0x18] sm:$0xff]
        %v408 = vld [vmem:[%s2 + $0x20] sm:$0xff]
        %v409 = vld [vmem:[%s2 + $0x28] sm:$0xff]
        %v410 = vld [vmem:[%s2 + $0x30] sm:$0xff]
        %v411 = vld [vmem:[%s2 + $0x38] sm:$0xff]
        %v412 = vld [vmem:[%s2 + $0x40] sm:$0xff]
        %v413 = vld [vmem:[%s2 + $0x48] sm:$0xff]
        %v414 = vld [vmem:[%s2 + $0x50] sm:$0xff]
        %v415 = vld [vmem:[%s2 + $0x58] sm:$0xff]
        %v416 = vld [vmem:[%s2 + $0x60] sm:$0xff]
        %v417 = vld [vmem:[%s2 + $0x68] sm:$0xff]
        %v418 = vld [vmem:[%s2 + $0x70] sm:$0xff]
        %v419 = vld [vmem:[%s2 + $0x78] sm:$0xff]
        %421 = vset.pattern.permute.xlu0 0
        %422 = vperm.xlu0 %421, %v404
        %v423 = vpop.permute.xlu0 %422
        %426 = vset.pattern.permute.xlu0 0
        %427 = vperm.xlu0 %426, %v405
        %v428 = vpop.permute.xlu0 %427
        %431 = vset.pattern.permute.xlu0 0
        %432 = vperm.xlu0 %431, %v406
        %v433 = vpop.permute.xlu0 %432
        %436 = vset.pattern.permute.xlu0 0
        %437 = vperm.xlu0 %436, %v407
        %v438 = vpop.permute.xlu0 %437
        %441 = vset.pattern.permute.xlu0 0
        %442 = vperm.xlu0 %441, %v408
        %v443 = vpop.permute.xlu0 %442
        %446 = vset.pattern.permute.xlu0 0
        %447 = vperm.xlu0 %446, %v409
        %v448 = vpop.permute.xlu0 %447
        %451 = vset.pattern.permute.xlu0 0
        %452 = vperm.xlu0 %451, %v410
        %v453 = vpop.permute.xlu0 %452
        %456 = vset.pattern.permute.xlu0 0
        %457 = vperm.xlu0 %456, %v411
        %v458 = vpop.permute.xlu0 %457
        %461 = vset.pattern.permute.xlu0 0
        %462 = vperm.xlu0 %461, %v412
        %v463 = vpop.permute.xlu0 %462
        %466 = vset.pattern.permute.xlu0 0
        %467 = vperm.xlu0 %466, %v413
        %v468 = vpop.permute.xlu0 %467
        %471 = vset.pattern.permute.xlu0 0
        %472 = vperm.xlu0 %471, %v414
        %v473 = vpop.permute.xlu0 %472
        %476 = vset.pattern.permute.xlu0 0
        %477 = vperm.xlu0 %476, %v415
        %v478 = vpop.permute.xlu0 %477
        %481 = vset.pattern.permute.xlu0 0
        %482 = vperm.xlu0 %481, %v416
        %v483 = vpop.permute.xlu0 %482
        %486 = vset.pattern.permute.xlu0 0
        %487 = vperm.xlu0 %486, %v417
        %v488 = vpop.permute.xlu0 %487
        %491 = vset.pattern.permute.xlu0 0
        %492 = vperm.xlu0 %491, %v418
        %v493 = vpop.permute.xlu0 %492
        %496 = vset.pattern.permute.xlu0 0
        %497 = vperm.xlu0 %496, %v419
        %v498 = vpop.permute.xlu0 %497
        %vm500 = vcmask 261120
        %v502 = vsel %vm500, %v356, 0
        %v505 = vsel %vm500, %v357, 0
        %v508 = vsel %vm500, %v358, 0
        %v511 = vsel %vm500, %v359, 0
        %v514 = vsel %vm500, %v360, 0
        %v517 = vsel %vm500, %v361, 0
        %v520 = vsel %vm500, %v362, 0
        %v523 = vsel %vm500, %v363, 0
        %v526 = vsel %vm500, %v364, 0
        %v529 = vsel %vm500, %v365, 0
        %v532 = vsel %vm500, %v366, 0
        %v535 = vsel %vm500, %v367, 0
        %v538 = vsel %vm500, %v368, 0
        %v541 = vsel %vm500, %v369, 0
        %v544 = vsel %vm500, %v370, 0
        %v547 = vsel %vm500, %v371, 0
        %v550 = vsel %vm500, %v372, 0
        %v553 = vsel %vm500, %v373, 0
        %v556 = vsel %vm500, %v374, 0
        %v559 = vsel %vm500, %v375, 0
        %v562 = vsel %vm500, %v376, 0
        %v565 = vsel %vm500, %v377, 0
        %v568 = vsel %vm500, %v378, 0
        %v571 = vsel %vm500, %v379, 0
        %v574 = vsel %vm500, %v380, 0
        %v577 = vsel %vm500, %v381, 0
        %v580 = vsel %vm500, %v382, 0
        %v583 = vsel %vm500, %v383, 0
        %v586 = vsel %vm500, %v384, 0
        %v589 = vsel %vm500, %v385, 0
        %v592 = vsel %vm500, %v386, 0
        %v595 = vsel %vm500, %v387, 0
        %v598 = vsel %vm500, %v388, 0
        %v601 = vsel %vm500, %v389, 0
        %v604 = vsel %vm500, %v390, 0
        %v607 = vsel %vm500, %v391, 0
        %v610 = vsel %vm500, %v392, 0
        %v613 = vsel %vm500, %v393, 0
        %v616 = vsel %vm500, %v394, 0
        %v619 = vsel %vm500, %v395, 0
        %v622 = vsel %vm500, %v396, 0
        %v625 = vsel %vm500, %v397, 0
        %v628 = vsel %vm500, %v398, 0
        %v631 = vsel %vm500, %v399, 0
        %v634 = vsel %vm500, %v400, 0
        %v637 = vsel %vm500, %v401, 0
        %v640 = vsel %vm500, %v402, 0
        %v643 = vsel %vm500, %v403, 0
        %645 = vmatprep.subr.mxu0 0.0
        %646 = vmatpush1.xpose.msra.mxu0 %v595
        %647 = vmatprep.subr.mxu0 0.0
        %648 = vmatpush1.xpose.msra.mxu0 %v592
        %649 = vmatprep.subr.mxu0 0.0
        %650 = vmatpush1.xpose.msra.mxu0 %v589
        %651 = vmatprep.subr.mxu0 0.0
        %652 = vmatpush1.xpose.msra.mxu0 %v586
        %653 = vmatprep.subr.mxu0 0.0
        %654 = vmatpush1.xpose.msra.mxu0 %v583
        %655 = vmatprep.subr.mxu0 0.0
        %656 = vmatpush1.xpose.msra.mxu0 %v580
        %657 = vmatprep.subr.mxu0 0.0
        %658 = vmatpush1.xpose.msra.mxu0 %v577
        %659 = vmatprep.subr.mxu0 0.0
        %660 = vmatpush1.xpose.msra.mxu0 %v574
        %661 = vmatprep.subr.mxu0 0.0
        %662 = vmatpush1.xpose.msra.mxu0 %v571
        %663 = vmatprep.subr.mxu0 0.0
        %664 = vmatpush1.xpose.msra.mxu0 %v568
        %665 = vmatprep.subr.mxu0 0.0
        %666 = vmatpush1.xpose.msra.mxu0 %v565
        %667 = vmatprep.subr.mxu0 0.0
        %668 = vmatpush1.xpose.msra.mxu0 %v562
        %669 = vmatprep.subr.mxu0 0.0
        %670 = vmatpush1.xpose.msra.mxu0 %v559
        %671 = vmatprep.subr.mxu0 0.0
        %672 = vmatpush1.xpose.msra.mxu0 %v556
        %673 = vmatprep.subr.mxu0 0.0
        %674 = vmatpush1.xpose.msra.mxu0 %v553
        %675 = vmatprep.subr.mxu0 0.0
        %676 = vmatpush1.xpose.msra.mxu0 %v550
        %677 = vmatprep.subr.mxu0 0.0
        %678 = vmatpush2.xpose.msra.mxu0 %v643
        %679 = vmatprep.subr.mxu0 0.0
        %680 = vmatpush2.xpose.msra.mxu0 %v640
        %681 = vmatprep.subr.mxu0 0.0
        %682 = vmatpush2.xpose.msra.mxu0 %v637
        %683 = vmatprep.subr.mxu0 0.0
        %684 = vmatpush2.xpose.msra.mxu0 %v634
        %685 = vmatprep.subr.mxu0 0.0
        %686 = vmatpush2.xpose.msra.mxu0 %v631
        %687 = vmatprep.subr.mxu0 0.0
        %688 = vmatpush2.xpose.msra.mxu0 %v628
        %689 = vmatprep.subr.mxu0 0.0
        %690 = vmatpush2.xpose.msra.mxu0 %v625
        %691 = vmatprep.subr.mxu0 0.0
        %692 = vmatpush2.xpose.msra.mxu0 %v622
        %693 = vmatprep.subr.mxu0 0.0
        %694 = vmatpush2.xpose.msra.mxu0 %v619
        %695 = vmatprep.subr.mxu0 0.0
        %696 = vmatpush2.xpose.msra.mxu0 %v616
        %697 = vmatprep.subr.mxu0 0.0
        %698 = vmatpush2.xpose.msra.mxu0 %v613
        %699 = vmatprep.subr.mxu0 0.0
        %700 = vmatpush2.xpose.msra.mxu0 %v610
        %701 = vmatprep.subr.mxu0 0.0
        %702 = vmatpush2.xpose.msra.mxu0 %v607
        %703 = vmatprep.subr.mxu0 0.0
        %704 = vmatpush2.xpose.msra.mxu0 %v604
        %705 = vmatprep.subr.mxu0 0.0
        %706 = vmatpush2.xpose.msra.mxu0 %v601
        %707 = vmatprep.subr.mxu0 0.0
        %708 = vmatpush2.xpose.msra.mxu0 %v598
        %709 = vmatprep.mubr.f32.mxu0 0.0
        %710 = vmatmul.mubr.f32.gmra.mxu0 %v502
        %v711 = vpop.f32.mrf.mxu0
        %v712 = vadd.f32 %v423, %v711
        %v713 = vpop.f32.mrf.mxu0
        %v714 = vadd.f32 %v423, %v713
        %715 = vmatprep.mubr.f32.mxu0 0.0
        %716 = vmatmul.mubr.f32.gmra.mxu0 %v505
        %v717 = vpop.f32.mrf.mxu0
        %v718 = vadd.f32 %v428, %v717
        %v719 = vpop.f32.mrf.mxu0
        %v720 = vadd.f32 %v428, %v719
        %721 = vmatprep.mubr.f32.mxu0 0.0
        %722 = vmatmul.mubr.f32.gmra.mxu0 %v508
        %v723 = vpop.f32.mrf.mxu0
        %v724 = vadd.f32 %v433, %v723
        %v725 = vpop.f32.mrf.mxu0
        %v726 = vadd.f32 %v433, %v725
        %727 = vmatprep.mubr.f32.mxu0 0.0
        %728 = vmatmul.mubr.f32.gmra.mxu0 %v511
        %v729 = vpop.f32.mrf.mxu0
        %v730 = vadd.f32 %v438, %v729
        %v731 = vpop.f32.mrf.mxu0
        %v732 = vadd.f32 %v438, %v731
        %733 = vmatprep.mubr.f32.mxu0 0.0
        %734 = vmatmul.mubr.f32.gmra.mxu0 %v514
        %v735 = vpop.f32.mrf.mxu0
        %v736 = vadd.f32 %v443, %v735
        %v737 = vpop.f32.mrf.mxu0
        %v738 = vadd.f32 %v443, %v737
        %739 = vmatprep.mubr.f32.mxu0 0.0
        %740 = vmatmul.mubr.f32.gmra.mxu0 %v517
        %v741 = vpop.f32.mrf.mxu0
        %v742 = vadd.f32 %v448, %v741
        %v743 = vpop.f32.mrf.mxu0
        %v744 = vadd.f32 %v448, %v743
        %745 = vmatprep.mubr.f32.mxu0 0.0
        %746 = vmatmul.mubr.f32.gmra.mxu0 %v520
        %v747 = vpop.f32.mrf.mxu0
        %v748 = vadd.f32 %v453, %v747
        %v749 = vpop.f32.mrf.mxu0
        %v750 = vadd.f32 %v453, %v749
        %751 = vmatprep.mubr.f32.mxu0 0.0
        %752 = vmatmul.mubr.f32.gmra.mxu0 %v523
        %v753 = vpop.f32.mrf.mxu0
        %v754 = vadd.f32 %v458, %v753
        %v755 = vpop.f32.mrf.mxu0
        %v756 = vadd.f32 %v458, %v755
        %757 = vmatprep.mubr.f32.mxu0 0.0
        %758 = vmatmul.mubr.f32.gmra.mxu0 %v526
        %v759 = vpop.f32.mrf.mxu0
        %v760 = vadd.f32 %v463, %v759
        %v761 = vpop.f32.mrf.mxu0
        %v762 = vadd.f32 %v463, %v761
        %763 = vmatprep.mubr.f32.mxu0 0.0
        %764 = vmatmul.mubr.f32.gmra.mxu0 %v529
        %v765 = vpop.f32.mrf.mxu0
        %v766 = vadd.f32 %v468, %v765
        %v767 = vpop.f32.mrf.mxu0
        %v768 = vadd.f32 %v468, %v767
        %769 = vmatprep.mubr.f32.mxu0 0.0
        %770 = vmatmul.mubr.f32.gmra.mxu0 %v532
        %v771 = vpop.f32.mrf.mxu0
        %v772 = vadd.f32 %v473, %v771
        %v773 = vpop.f32.mrf.mxu0
        %v774 = vadd.f32 %v473, %v773
        %775 = vmatprep.mubr.f32.mxu0 0.0
        %776 = vmatmul.mubr.f32.gmra.mxu0 %v535
        %v777 = vpop.f32.mrf.mxu0
        %v778 = vadd.f32 %v478, %v777
        %v779 = vpop.f32.mrf.mxu0
        %v780 = vadd.f32 %v478, %v779
        %781 = vmatprep.mubr.f32.mxu0 0.0
        %782 = vmatmul.mubr.f32.gmra.mxu0 %v538
        %v783 = vpop.f32.mrf.mxu0
        %v784 = vadd.f32 %v483, %v783
        %v785 = vpop.f32.mrf.mxu0
        %v786 = vadd.f32 %v483, %v785
        %787 = vmatprep.mubr.f32.mxu0 0.0
        %788 = vmatmul.mubr.f32.gmra.mxu0 %v541
        %v789 = vpop.f32.mrf.mxu0
        %v790 = vadd.f32 %v488, %v789
        %v791 = vpop.f32.mrf.mxu0
        %v792 = vadd.f32 %v488, %v791
        %793 = vmatprep.mubr.f32.mxu0 0.0
        %794 = vmatmul.mubr.f32.gmra.mxu0 %v544
        %v795 = vpop.f32.mrf.mxu0
        %v796 = vadd.f32 %v493, %v795
        %v797 = vpop.f32.mrf.mxu0
        %v798 = vadd.f32 %v493, %v797
        %799 = vmatprep.mubr.f32.mxu0 0.0
        %800 = vmatmul.mubr.f32.gmra.mxu0 %v547
        %v801 = vpop.f32.mrf.mxu0
        %v802 = vadd.f32 %v498, %v801
        %v803 = vpop.f32.mrf.mxu0
        %v804 = vadd.f32 %v498, %v803
        %805 = vdwg.mxu0
        %v806 = vmax.f32 %v712, 0.0
        %v807 = vmax.f32 %v714, 0.0
        %v808 = vmax.f32 %v718, 0.0
        %v809 = vmax.f32 %v720, 0.0
        %v810 = vmax.f32 %v724, 0.0
        %v811 = vmax.f32 %v726, 0.0
        %v812 = vmax.f32 %v730, 0.0
        %v813 = vmax.f32 %v732, 0.0
        %v814 = vmax.f32 %v736, 0.0
        %v815 = vmax.f32 %v738, 0.0
        %v816 = vmax.f32 %v742, 0.0
        %v817 = vmax.f32 %v744, 0.0
        %v818 = vmax.f32 %v748, 0.0
        %v819 = vmax.f32 %v750, 0.0
        %v820 = vmax.f32 %v754, 0.0
        %v821 = vmax.f32 %v756, 0.0
        %v822 = vmax.f32 %v760, 0.0
        %v823 = vmax.f32 %v762, 0.0
        %v824 = vmax.f32 %v766, 0.0
        %v825 = vmax.f32 %v768, 0.0
        %v826 = vmax.f32 %v772, 0.0
        %v827 = vmax.f32 %v774, 0.0
        %v828 = vmax.f32 %v778, 0.0
        %v829 = vmax.f32 %v780, 0.0
        %v830 = vmax.f32 %v784, 0.0
        %v831 = vmax.f32 %v786, 0.0
        %v832 = vmax.f32 %v790, 0.0
        %v833 = vmax.f32 %v792, 0.0
        %v834 = vmax.f32 %v796, 0.0
        %v835 = vmax.f32 %v798, 0.0
        %v836 = vmax.f32 %v802, 0.0
        %v837 = vmax.f32 %v804, 0.0
        %v838 = vld [vmem:[%s3] sm:$0xf]
        %v839 = vld [vmem:[%s3 + $0x4] sm:$0xf]
        %v840 = vld [vmem:[%s3 + $0x8] sm:$0xf]
        %v841 = vld [vmem:[%s3 + $0xc] sm:$0xf]
        %v842 = vld [vmem:[%s3 + $0x10] sm:$0xf]
        %v843 = vld [vmem:[%s3 + $0x14] sm:$0xf]
        %v844 = vld [vmem:[%s3 + $0x18] sm:$0xf]
        %v845 = vld [vmem:[%s3 + $0x1c] sm:$0xf]
        %v846 = vpack.c.bf16 %v808, %v806
        %v847 = vpack.c.bf16 %v809, %v807
        %v848 = vpack.c.bf16 %v812, %v810
        %v849 = vpack.c.bf16 %v813, %v811
        %v850 = vpack.c.bf16 %v816, %v814
        %v851 = vpack.c.bf16 %v817, %v815
        %v852 = vpack.c.bf16 %v820, %v818
        %v853 = vpack.c.bf16 %v821, %v819
        %v854 = vpack.c.bf16 %v824, %v822
        %v855 = vpack.c.bf16 %v825, %v823
        %v856 = vpack.c.bf16 %v828, %v826
        %v857 = vpack.c.bf16 %v829, %v827
        %v858 = vpack.c.bf16 %v832, %v830
        %v859 = vpack.c.bf16 %v833, %v831
        %v860 = vpack.c.bf16 %v836, %v834
        %v861 = vpack.c.bf16 %v837, %v835
        %v862 = vld [vmem:[%s4] sm:$0xff]
        %v863 = vld [vmem:[%s4 + $0x8] sm:$0xff]
        %v864 = vld [vmem:[%s4 + $0x10] sm:$0xff]
        %v865 = vld [vmem:[%s4 + $0x18] sm:$0xff]
        %v866 = vld [vmem:[%s4 + $0x20] sm:$0xff]
        %v867 = vld [vmem:[%s4 + $0x28] sm:$0xff]
        %v868 = vld [vmem:[%s4 + $0x30] sm:$0xff]
        %v869 = vld [vmem:[%s4 + $0x38] sm:$0xff]
        %871 = vset.pattern.permute.xlu0 0
        %872 = vperm.xlu0 %871, %v862
        %v873 = vpop.permute.xlu0 %872
        %876 = vset.pattern.permute.xlu0 0
        %877 = vperm.xlu0 %876, %v863
        %v878 = vpop.permute.xlu0 %877
        %881 = vset.pattern.permute.xlu0 0
        %882 = vperm.xlu0 %881, %v864
        %v883 = vpop.permute.xlu0 %882
        %886 = vset.pattern.permute.xlu0 0
        %887 = vperm.xlu0 %886, %v865
        %v888 = vpop.permute.xlu0 %887
        %891 = vset.pattern.permute.xlu0 0
        %892 = vperm.xlu0 %891, %v866
        %v893 = vpop.permute.xlu0 %892
        %896 = vset.pattern.permute.xlu0 0
        %897 = vperm.xlu0 %896, %v867
        %v898 = vpop.permute.xlu0 %897
        %901 = vset.pattern.permute.xlu0 0
        %902 = vperm.xlu0 %901, %v868
        %v903 = vpop.permute.xlu0 %902
        %906 = vset.pattern.permute.xlu0 0
        %907 = vperm.xlu0 %906, %v869
        %v908 = vpop.permute.xlu0 %907
        %v918 = vunpack.c.l.b16 %v838
        %v919 = vunpack.c.l.b16 %v839
        %v920 = vunpack.c.l.b16 %v840
        %v921 = vunpack.c.l.b16 %v841
        %v922 = vunpack.c.l.b16 %v842
        %v923 = vunpack.c.l.b16 %v843
        %v924 = vunpack.c.l.b16 %v844
        %v925 = vunpack.c.l.b16 %v845
        %v926 = vpack.c.b16 %v919, %v918
        %v927 = vpack.c.b16 %v921, %v920
        %v928 = vpack.c.b16 %v923, %v922
        %v929 = vpack.c.b16 %v925, %v924
        %934 = vmatprep.subr.bf16.mxu0 %v861
        %935 = vmatpush1.bf16.msra.mxu0 %v860
        %936 = vmatprep.subr.bf16.mxu0 %v859
        %937 = vmatpush1.bf16.msra.mxu0 %v858
        %938 = vmatprep.subr.bf16.mxu0 %v857
        %939 = vmatpush1.bf16.msra.mxu0 %v856
        %940 = vmatprep.subr.bf16.mxu0 %v855
        %941 = vmatpush1.bf16.msra.mxu0 %v854
        %942 = vmatprep.subr.bf16.mxu0 %v853
        %943 = vmatpush1.bf16.msra.mxu0 %v852
        %944 = vmatprep.subr.bf16.mxu0 %v851
        %945 = vmatpush1.bf16.msra.mxu0 %v850
        %946 = vmatprep.subr.bf16.mxu0 %v849
        %947 = vmatpush1.bf16.msra.mxu0 %v848
        %948 = vmatprep.subr.bf16.mxu0 %v847
        %949 = vmatpush1.bf16.msra.mxu0 %v846
        %950 = vmatprep.subr.bf16.mxu0 0
        %951 = vmatpush2.bf16.msra.mxu0 0
        %952 = vmatprep.subr.bf16.mxu0 0
        %953 = vmatpush2.bf16.msra.mxu0 0
        %954 = vmatprep.subr.bf16.mxu0 0
        %955 = vmatpush2.bf16.msra.mxu0 0
        %956 = vmatprep.subr.bf16.mxu0 0
        %957 = vmatpush2.bf16.msra.mxu0 0
        %958 = vmatprep.subr.bf16.mxu0 0
        %959 = vmatpush2.bf16.msra.mxu0 0
        %960 = vmatprep.subr.bf16.mxu0 0
        %961 = vmatpush2.bf16.msra.mxu0 0
        %962 = vmatprep.subr.bf16.mxu0 0
        %963 = vmatpush2.bf16.msra.mxu0 0
        %964 = vmatprep.subr.bf16.mxu0 0
        %965 = vmatpush2.bf16.msra.mxu0 0
        %966 = vmatprep.mubr.bf16.mxu0 0
        %967 = vmatmul.mubr.bf16.gmra.mxu0 %v926
        %v968 = vpop.f32.mrf.mxu0
        %v969 = vadd.f32 %v873, %v968
        %v970 = vpop.f32.mrf.mxu0
        %v971 = vadd.f32 %v873, %v970
        %v972 = vpop.f32.mrf.mxu0
        %v973 = vadd.f32 %v878, %v972
        %v974 = vpop.f32.mrf.mxu0
        %v975 = vadd.f32 %v878, %v974
        %976 = vmatprep.mubr.bf16.mxu0 0
        %977 = vmatmul.mubr.bf16.gmra.mxu0 %v927
        %v978 = vpop.f32.mrf.mxu0
        %v979 = vadd.f32 %v883, %v978
        %v980 = vpop.f32.mrf.mxu0
        %v981 = vadd.f32 %v883, %v980
        %v982 = vpop.f32.mrf.mxu0
        %v983 = vadd.f32 %v888, %v982
        %v984 = vpop.f32.mrf.mxu0
        %v985 = vadd.f32 %v888, %v984
        %986 = vmatprep.mubr.bf16.mxu0 0
        %987 = vmatmul.mubr.bf16.gmra.mxu0 %v928
        %v988 = vpop.f32.mrf.mxu0
        %v989 = vadd.f32 %v893, %v988
        %v990 = vpop.f32.mrf.mxu0
        %v991 = vadd.f32 %v893, %v990
        %v992 = vpop.f32.mrf.mxu0
        %v993 = vadd.f32 %v898, %v992
        %v994 = vpop.f32.mrf.mxu0
        %v995 = vadd.f32 %v898, %v994
        %996 = vmatprep.mubr.bf16.mxu0 0
        %997 = vmatmul.mubr.bf16.gmra.mxu0 %v929
        %v998 = vpop.f32.mrf.mxu0
        %v999 = vadd.f32 %v903, %v998
        %v1000 = vpop.f32.mrf.mxu0
        %v1001 = vadd.f32 %v903, %v1000
        %v1002 = vpop.f32.mrf.mxu0
        %v1003 = vadd.f32 %v908, %v1002
        %v1004 = vpop.f32.mrf.mxu0
        %v1005 = vadd.f32 %v908, %v1004
        %1006 = vdwg.mxu0
        %v1007 = vmax.f32 %v969, 0.0
        %v1008 = vmax.f32 %v971, 0.0
        %v1009 = vmax.f32 %v973, 0.0
        %v1010 = vmax.f32 %v975, 0.0
        %v1011 = vmax.f32 %v979, 0.0
        %v1012 = vmax.f32 %v981, 0.0
        %v1013 = vmax.f32 %v983, 0.0
        %v1014 = vmax.f32 %v985, 0.0
        %v1015 = vmax.f32 %v989, 0.0
        %v1016 = vmax.f32 %v991, 0.0
        %v1017 = vmax.f32 %v993, 0.0
        %v1018 = vmax.f32 %v995, 0.0
        %v1019 = vmax.f32 %v999, 0.0
        %v1020 = vmax.f32 %v1001, 0.0
        %v1021 = vmax.f32 %v1003, 0.0
        %v1022 = vmax.f32 %v1005, 0.0
        %v1023 = vld [vmem:[%s5] sm:$0xf]
        %v1024 = vld [vmem:[%s5 + $0x4] sm:$0xf]
        %v1025 = vld [vmem:[%s5 + $0x8] sm:$0xf]
        %v1026 = vld [vmem:[%s5 + $0xc] sm:$0xf]
        %v1027 = vpack.c.bf16 %v1009, %v1007
        %v1028 = vpack.c.bf16 %v1010, %v1008
        %v1029 = vpack.c.bf16 %v1013, %v1011
        %v1030 = vpack.c.bf16 %v1014, %v1012
        %v1031 = vpack.c.bf16 %v1017, %v1015
        %v1032 = vpack.c.bf16 %v1018, %v1016
        %v1033 = vpack.c.bf16 %v1021, %v1019
        %v1034 = vpack.c.bf16 %v1022, %v1020
        %v1035 = vld [vmem:[%s6] sm:$0xff]
        %v1036 = vld [vmem:[%s6 + $0x8] sm:$0xff]
        %v1037 = vld [vmem:[%s6 + $0x10] sm:$0xff]
        %v1038 = vld [vmem:[%s6 + $0x18] sm:$0xff]
        %1040 = vset.pattern.permute.xlu0 0
        %1041 = vperm.xlu0 %1040, %v1035
        %v1042 = vpop.permute.xlu0 %1041
        %1045 = vset.pattern.permute.xlu0 0
        %1046 = vperm.xlu0 %1045, %v1036
        %v1047 = vpop.permute.xlu0 %1046
        %1050 = vset.pattern.permute.xlu0 0
        %1051 = vperm.xlu0 %1050, %v1037
        %v1052 = vpop.permute.xlu0 %1051
        %1055 = vset.pattern.permute.xlu0 0
        %1056 = vperm.xlu0 %1055, %v1038
        %v1057 = vpop.permute.xlu0 %1056
        %v1063 = vunpack.c.l.b16 %v1023
        %v1064 = vunpack.c.l.b16 %v1024
        %v1065 = vunpack.c.l.b16 %v1025
        %v1066 = vunpack.c.l.b16 %v1026
        %v1067 = vpack.c.b16 %v1064, %v1063
        %v1068 = vpack.c.b16 %v1066, %v1065
        %vm1069 = vcmask 523264
        %v1071 = vsel %vm1069, %v1067, 0
        %v1074 = vsel %vm1069, %v1068, 0
        %1076 = vmatprep.subr.bf16.mxu0 0
        %1077 = vmatpush1.bf16.msra.mxu0 0
        %1078 = vmatprep.subr.bf16.mxu0 0
        %1079 = vmatpush1.bf16.msra.mxu0 0
        %1080 = vmatprep.subr.bf16.mxu0 0
        %1081 = vmatpush1.bf16.msra.mxu0 0
        %1082 = vmatprep.subr.bf16.mxu0 0
        %1083 = vmatpush1.bf16.msra.mxu0 0
        %1084 = vmatprep.subr.bf16.mxu0 %v1034
        %1085 = vmatpush1.bf16.msra.mxu0 %v1033
        %1086 = vmatprep.subr.bf16.mxu0 %v1032
        %1087 = vmatpush1.bf16.msra.mxu0 %v1031
        %1088 = vmatprep.subr.bf16.mxu0 %v1030
        %1089 = vmatpush1.bf16.msra.mxu0 %v1029
        %1090 = vmatprep.subr.bf16.mxu0 %v1028
        %1091 = vmatpush1.bf16.msra.mxu0 %v1027
        %1092 = vmatprep.subr.bf16.mxu0 0
        %1093 = vmatpush2.bf16.msra.mxu0 0
        %1094 = vmatprep.subr.bf16.mxu0 0
        %1095 = vmatpush2.bf16.msra.mxu0 0
        %1096 = vmatprep.subr.bf16.mxu0 0
        %1097 = vmatpush2.bf16.msra.mxu0 0
        %1098 = vmatprep.subr.bf16.mxu0 0
        %1099 = vmatpush2.bf16.msra.mxu0 0
        %1100 = vmatprep.subr.bf16.mxu0 0
        %1101 = vmatpush2.bf16.msra.mxu0 0
        %1102 = vmatprep.subr.bf16.mxu0 0
        %1103 = vmatpush2.bf16.msra.mxu0 0
        %1104 = vmatprep.subr.bf16.mxu0 0
        %1105 = vmatpush2.bf16.msra.mxu0 0
        %1106 = vmatprep.subr.bf16.mxu0 0
        %1107 = vmatpush2.bf16.msra.mxu0 0
        %1108 = vmatprep.mubr.bf16.mxu0 0
        %1109 = vmatmul.mubr.bf16.gmra.mxu0 %v1071
        %v1110 = vpop.f32.mrf.mxu0
        %v1111 = vadd.f32 %v1042, %v1110
        %v1112 = vpop.f32.mrf.mxu0
        %v1113 = vadd.f32 %v1042, %v1112
        %v1114 = vpop.f32.mrf.mxu0
        %v1115 = vadd.f32 %v1047, %v1114
        %v1116 = vpop.f32.mrf.mxu0
        %v1117 = vadd.f32 %v1047, %v1116
        %1118 = vmatprep.mubr.bf16.mxu0 0
        %1119 = vmatmul.mubr.bf16.gmra.mxu0 %v1074
        %v1120 = vpop.f32.mrf.mxu0
        %v1121 = vadd.f32 %v1052, %v1120
        %v1122 = vpop.f32.mrf.mxu0
        %v1123 = vadd.f32 %v1052, %v1122
        %v1124 = vpop.f32.mrf.mxu0
        %v1125 = vadd.f32 %v1057, %v1124
        %v1126 = vpop.f32.mrf.mxu0
        %v1127 = vadd.f32 %v1057, %v1126
        %1128 = vdwg.mxu0
        %v1129 = vmax.f32 %v1111, 0.0
        %v1130 = vmax.f32 %v1113, 0.0
        %v1131 = vmax.f32 %v1115, 0.0
        %v1132 = vmax.f32 %v1117, 0.0
        %v1133 = vmax.f32 %v1121, 0.0
        %v1134 = vmax.f32 %v1123, 0.0
        %v1135 = vmax.f32 %v1125, 0.0
        %v1136 = vmax.f32 %v1127, 0.0
        %v1137 = vld [vmem:[%s7] sm:$0xff]
        %v1138 = vld [vmem:[%s7 + $0x8] sm:$0xff]
        %v1139 = vld [vmem:[%s7 + $0x10] sm:$0xff]
        %v1140 = vld [vmem:[%s7 + $0x18] sm:$0xff]
        %1142 = vset.pattern.permute.xlu0 0
        %1143 = vperm.xlu0 %1142, %v1137
        %v1144 = vpop.permute.xlu0 %1143
        %1147 = vset.pattern.permute.xlu0 0
        %1148 = vperm.xlu0 %1147, %v1138
        %v1149 = vpop.permute.xlu0 %1148
        %1152 = vset.pattern.permute.xlu0 0
        %1153 = vperm.xlu0 %1152, %v1139
        %v1154 = vpop.permute.xlu0 %1153
        %1157 = vset.pattern.permute.xlu0 0
        %1158 = vperm.xlu0 %1157, %v1140
        %v1159 = vpop.permute.xlu0 %1158
        %v1161 = vmul.f32 %v1129, %v1144
        %v1162 = vmul.f32 %v1130, %v1144
        %v1163 = vmul.f32 %v1131, %v1149
        %v1164 = vmul.f32 %v1132, %v1149
        %v1165 = vmul.f32 %v1133, %v1154
        %v1166 = vmul.f32 %v1134, %v1154
        %v1167 = vmul.f32 %v1135, %v1159
        %v1168 = vmul.f32 %v1136, %v1159
        %v1169 = vadd.f32 %v1161, %v1163
        %v1170 = vadd.f32 %v1169, %v1165
        %v1171 = vadd.f32 %v1170, %v1167
        %v1172 = vrot.slane %v1171, 4
        %v1173 = vadd.f32 %v1171, %v1172
        %v1174 = vrot.slane %v1173, 2
        %v1175 = vadd.f32 %v1173, %v1174
        %v1176 = vrot.slane %v1175, 1
        %v1177 = vadd.f32 %v1175, %v1176
        %v1178 = vadd.f32 %v1162, %v1164
        %v1179 = vadd.f32 %v1178, %v1166
        %v1180 = vadd.f32 %v1179, %v1168
        %v1181 = vrot.slane %v1180, 4
        %v1182 = vadd.f32 %v1180, %v1181
        %v1183 = vrot.slane %v1182, 2
        %v1184 = vadd.f32 %v1182, %v1183
        %v1185 = vrot.slane %v1184, 1
        %v1186 = vadd.f32 %v1184, %v1185
        %s1187 = sld [smem:[#allocation2]]
        %v1188 = vstv %s1187
        %v1189 = vadd.f32 %v1177, %v1188
        %v1190 = vadd.f32 %v1186, %v1188
        %v1191 = vsub.f32 0.0, %v1189
        %v1192 = vsub.f32 0.0, %v1190
        %v1193 = vmul.f32 %v1191, 1.442695
        %v1194 = vpow.pop %v1193
        %v1195 = vmul.f32 %v1192, 1.442695
        %v1196 = vpow.pop %v1195
        %v1197 = vadd.f32 %v1194, 1.0
        %v1198 = vadd.f32 %v1196, 1.0
        %v1199 = vrcp.pop %v1197
        %v1200 = vrcp.pop %v1198
        %v1203 = vcombine.low %v1199, %v1200
        %v1205 = vunpack.c.l.s4 1966171168
        %v1206 = vunpack.c.0.s8 %v1205
        %v1207 = vlaneseq
        %v1208 = vshrl.u32 %v1207, 7
        %v1209 = vsub.s32 %v1206, %v1208
        %v1210 = vrot.slane %v1203, %v1209
        %v1212 = vunpack.c.l.s4 1966171168
        %v1213 = vunpack.c.0.s8 %v1212
        %v1214 = vlaneseq
        %v1215 = vshrl.u32 %v1214, 7
        %v1216 = vsub.s32 %v1213, %v1215
        %v1217 = vrot.slane %v1210, %v1216
        %v1219 = vlaneseq
        %vm1220 = vcmp.ge.s32.totalorder %v1219, 0
        %vm1221 = vcmp.lt.s32.totalorder %v1219, 256
        %vm1222 = vmand %vm1220, %vm1221
        %1223 = vst.msk [vmem:[%s339] sm:$0x3] %vm1222, %v1217
        %s1224 = sand.u32 %s226, 1
        %s1225 = scalar_lea.sflag [#allocation4], %s1224
        %s1226 = sand.u32 %s226, 1
        %s1227 = smul.addr %s1226, 2
        %s1228 = scalar_lea.vmem [#allocation3], %s1227
        // Predicated region
        $region57: #{tpu_custom_call.1} parent=55 // pred_check
          %p1229 = pneg %p236
        $region58: #{tpu_custom_call.1} parent=55 // pred_check_branch
          %1231 = sbr.rel (%p1229) target = $region60
        $region59: #{tpu_custom_call.1} parent=55 // pred_region
          %s1232 = smul.u32 2, %s24
          %s1234 = ssub.s32 32, 32
          %1235 = vsyncadd %s1225, %s1234
          %s1236 = smul.addr %s1232, 16
          %s1237 = scalar_lea.hbm %s9, %s1236
          %s1239 = sshll.u32 %s1228, 4
          %s1240 = int_to_ptr.vmem [resolvable:$true] %s1239
          %1242 = dma.vmem_to_hbm [thread:$0]  %s1240, 32, %s1237, %s1225
        $region60: #{tpu_custom_call.1} parent=55 // pred_fallthru
          _
      $region56: #{tpu_custom_call.1} parent=5 // pred_fallthru
        _
      %p1243 = scmp.le.s32.totalorder 2, %s19
      // Predicated region
      $region61: #{tpu_custom_call.1} parent=5 // pred_check
        %p1244 = pneg %p1243
      $region62: #{tpu_custom_call.1} parent=5 // pred_check_branch
        %1246 = sbr.rel (%p1244) target = $region64
      $region63: #{tpu_custom_call.1} parent=5 // pred_region
        %s1247 = ssub.s32 %s19, 2
        // Predicated region
        $region65: #{tpu_custom_call.1} parent=63 // pred_check
          %p1248 = pneg %p242
        $region66: #{tpu_custom_call.1} parent=63 // pred_check_branch
          %1250 = sbr.rel (%p1248) target = $region68
        $region67: #{tpu_custom_call.1} parent=63 // pred_region
          %s1251 = sand.u32 %s227, 1
          %s1252 = scalar_lea.sflag [#allocation4], %s1251
          %s1253 = sand.u32 %s227, 1
          %s1254 = smul.addr %s1253, 2
          %s1255 = scalar_lea.vmem [#allocation3], %s1254
          %1256 = dma.done %s1252, 32
        $region68: #{tpu_custom_call.1} parent=63 // pred_fallthru
          _
      $region64: #{tpu_custom_call.1} parent=5 // pred_fallthru
        _
    $region6: #{tpu_custom_call.1} parent=1 // loop_footer
      %s23 = sadd.s32 1, %s19
    $region7: #{tpu_custom_call.1} parent=1 // loop_footer_branch
      %18 = sbr.rel target = $region3
    $region8: #{tpu_custom_call.1} parent=1 // loop_exit
      _
    %1257 = vsyncpa [#allocation4], 1
    %s1258 = scalar_lea.sflag [#allocation4], 1
    %1259 = vsyncpa %s1258, 1

</llo_original>
